<compile_context>
chip_gen: v5e
topology: v5e:2x2
jax: 0.10.0
libtpu: 0.0.40
codegen_flags: <defaults>
</compile_context>

<pallas_src>
import jax
import jax.numpy as jnp
from jax.experimental import pallas as pl
from jax.experimental.pallas import tpu as pltpu


_LANE = 128
_SUBLANE_BF16 = 16


def _round_up(a, b):
    return (a + b - 1) // b * b


def _default_token_tile():
    """Generation-specific token-tile default (review: v5e 256, v6e 1024, v7x 768)."""
    try:
        kind = jax.devices()[0].device_kind.lower()
    except Exception:
        return 512
    if "v5 lite" in kind or "v5e" in kind or "v5lite" in kind:
        return 256
    if "v6" in kind:
        return 1024
    if "v7" in kind or "tpu7" in kind or "7x" in kind:
        return 768
    return 512


def _make_weight_spec(h, tv, *, buffered):
    """Weight-stream BlockSpec; deeper pipelining only when the vocab grid is deep."""
    idx = lambda i, j: (0, j)
    if buffered and hasattr(pl, "Buffered"):
        try:
            return pl.BlockSpec((h, tv), idx, pipeline_mode=pl.Buffered(3))
        except TypeError:
            pass
    return pl.BlockSpec((h, tv), idx)


def _weighted_adapter_kernel(x_ref, w_ref, xl_ref, b_ref, o_ref):
    # One (tm, tv) logits tile:
    #   full-depth (K = hidden) base matmul  +  tiny (K = padded 2*rank) LoRA matmul,
    # both accumulated in f32 on the MXU.  The frozen base projection, both LoRA
    # deltas and the alpha-weighted blend all fall out of these two dots because
    # the alpha/scaling factors were folded into the (M, r) LoRA activations.
    acc = jnp.dot(x_ref[...], w_ref[...], preferred_element_type=jnp.float32)
    acc = acc + jnp.dot(xl_ref[...], b_ref[...], preferred_element_type=jnp.float32)
    o_ref[...] = acc.astype(o_ref.dtype)


def prepare_weighted_adapter_weights(w, a_g, b_g, a_l, b_l, *, scaling=2.0,
                                     tv=512, compute_dtype=jnp.bfloat16):
    """One-time (per adapter update) weight preparation.

    Casts the frozen lm_head weight and both LoRA-B matrices to the compute
    dtype, pads the vocab axis to the vocab tile and the LoRA K axis to a lane
    multiple, and concatenates the tiny LoRA matrices.  None of this happens
    per forward call, so the (H, V) weight is never re-written at runtime.
    """
    H, V = w.shape
    r = a_g.shape[1]

    tv = _round_up(min(tv, _round_up(V, _LANE)), _LANE)
    Vp = _round_up(V, tv)
    # Keep the vocab grid extent even (when it is > 1) so v7x's two TensorCores
    # split the 'parallel' vocab axis cleanly even when M // tm is small.
    if (Vp // tv) % 2 == 1 and Vp // tv > 1:
        Vp += tv

    Kr = _round_up(2 * r, _LANE)

    # Cast each piece to the compute dtype BEFORE concatenation / padding so no
    # f32 (K, V) temporary is ever materialized.
    w_c = jnp.pad(w.astype(compute_dtype), ((0, 0), (0, Vp - V)))
    b_cat = jnp.concatenate(
        [b_g.astype(compute_dtype), b_l.astype(compute_dtype)], axis=0)       # (2r, V)
    b_cat = jnp.pad(b_cat, ((0, Kr - 2 * r), (0, Vp - V)))                    # (Kr, Vp)
    a_cat = jnp.concatenate(
        [a_g.astype(compute_dtype), a_l.astype(compute_dtype)], axis=1)       # (H, 2r)

    return dict(w=w_c, b_cat=b_cat, a_cat=a_cat,
                hidden=H, vocab=V, vocab_padded=Vp, rank=r, k_lora=Kr,
                tv=tv, scaling=float(scaling), compute_dtype=compute_dtype)


def weighted_adapter_forward(x, prepared, *, alpha=0.5, tm=None,
                             out_dtype=jnp.bfloat16, vmem_limit_bytes=None):
    """x: (B, S, H) activations; returns combined logits (B, S, V) in out_dtype."""
    H = prepared["hidden"]
    V = prepared["vocab"]
    Vp = prepared["vocab_padded"]
    r = prepared["rank"]
    Kr = prepared["k_lora"]
    tv = prepared["tv"]
    scaling = prepared["scaling"]
    cdt = prepared["compute_dtype"]

    B, S, _ = x.shape
    M = B * S

    # Activations go straight to the compute dtype (no f32 round-trip).
    x2 = x.reshape(M, H).astype(cdt)

    # Hoisted, tiny (M, 2r) LoRA-A projection.  alpha is folded into the (M, r)
    # products (algebraically exact), so it stays a runtime value - no recompile
    # and no per-tile global/local logits temporaries.
    xa = jnp.dot(x2, prepared["a_cat"], preferred_element_type=jnp.float32)
    scale = jnp.concatenate([
        jnp.full((r,), scaling, jnp.float32) * alpha,
        jnp.full((r,), scaling, jnp.float32) * (1.0 - alpha)])
    xl = (xa * scale[None, :]).astype(cdt)
    if Kr > 2 * r:
        xl = jnp.pad(xl, ((0, 0), (0, Kr - 2 * r)))

    # Token tile: generation default, clamped to the problem, multiple of 16
    # (bf16 sublane packing).  Non-divisible M handled by zero-row padding.
    if tm is None:
        tm = _default_token_tile()
    tm = _round_up(min(int(tm), _round_up(M, _SUBLANE_BF16)), _SUBLANE_BF16)
    Mp = _round_up(M, tm)
    if Mp > M:
        x2 = jnp.pad(x2, ((0, Mp - M), (0, 0)))
        xl = jnp.pad(xl, ((0, Mp - M), (0, 0)))

    grid_m, grid_v = Mp // tm, Vp // tv
    cdt_bytes = jnp.dtype(cdt).itemsize
    out_bytes = jnp.dtype(out_dtype).itemsize

    use_buffered = grid_v >= 3
    w_spec = _make_weight_spec(H, tv, buffered=use_buffered)

    # VMEM budget from the actual double-buffered footprint, with headroom and a
    # cap that stays safe on v7x's 64 MiB VMEM (v5e/v6e have 128 MiB physical).
    wbufs = 3 if use_buffered else 2
    vmem_est = ((2 * tm * H + wbufs * H * tv + 2 * tm * Kr + 2 * Kr * tv) * cdt_bytes
                + 2 * tm * tv * out_bytes)
    if vmem_limit_bytes is None:
        vmem_limit_bytes = max(32 << 20,
                               min(56 << 20, int(vmem_est * 1.3) + (2 << 20)))

    cost = pl.CostEstimate(
        flops=2 * Mp * (H + Kr) * Vp,
        bytes_accessed=((Mp * H + Mp * Kr) * cdt_bytes * grid_v
                        + (H * Vp + Kr * Vp) * cdt_bytes
                        + Mp * Vp * out_bytes),
        transcendentals=0)

    out = pl.pallas_call(
        _weighted_adapter_kernel,
        out_shape=jax.ShapeDtypeStruct((Mp, Vp), out_dtype),
        grid_spec=pl.GridSpec(
            grid=(grid_m, grid_v),
            in_specs=[
                # Activation tile (revisited across the vocab axis).
                pl.BlockSpec((tm, H), lambda i, j: (i, 0)),
                # Frozen base weight vocab slice (the only large per-step DMA).
                w_spec,
                # Tiny alpha/scaling-folded LoRA activations.
                pl.BlockSpec((tm, Kr), lambda i, j: (i, 0)),
                # Cached [B_g; B_l] vocab slice.
                pl.BlockSpec((Kr, tv), lambda i, j: (0, j)),
            ],
            out_specs=pl.BlockSpec((tm, tv), lambda i, j: (i, j)),
        ),
        compiler_params=pltpu.CompilerParams(
            dimension_semantics=("parallel", "parallel"),
            vmem_limit_bytes=vmem_limit_bytes),
        cost_estimate=cost,
    )(x2, prepared["w"], xl, prepared["b_cat"])

    return out[:M, :V].reshape(B, S, V)


def reference_forward(x, w, a_g, b_g, a_l, b_l, *, alpha=0.5, scaling=2.0):
    """Module semantics in pure f32 (two full adapter forwards + alpha blend)."""
    B, S, H = x.shape
    f32 = jnp.float32
    x2 = x.reshape(B * S, H).astype(f32)
    base = x2 @ w.astype(f32)
    lg = base + scaling * ((x2 @ a_g.astype(f32)) @ b_g.astype(f32))
    ll = base + scaling * ((x2 @ a_l.astype(f32)) @ b_l.astype(f32))
    return (alpha * lg + (1.0 - alpha) * ll).reshape(B, S, -1)


def reference_forward_matched(x, w, a_g, b_g, a_l, b_l, *, alpha=0.5,
                              scaling=2.0, compute_dtype=jnp.bfloat16,
                              out_dtype=jnp.bfloat16):
    """Same fused math, bf16 operands, f32 accumulation as the kernel path."""
    B, S, H = x.shape
    f32 = jnp.float32
    x2 = x.reshape(B * S, H).astype(compute_dtype)
    base = jnp.dot(x2, w.astype(compute_dtype), preferred_element_type=f32)
    xa_g = jnp.dot(x2, a_g.astype(compute_dtype), preferred_element_type=f32)
    xa_l = jnp.dot(x2, a_l.astype(compute_dtype), preferred_element_type=f32)
    dg = jnp.dot((xa_g * (alpha * scaling)).astype(compute_dtype),
                 b_g.astype(compute_dtype), preferred_element_type=f32)
    dl = jnp.dot((xa_l * ((1.0 - alpha) * scaling)).astype(compute_dtype),
                 b_l.astype(compute_dtype), preferred_element_type=f32)
    return (base + dg + dl).astype(out_dtype).reshape(B, S, -1)


if __name__ == "__main__":
    # Small, deterministic synthetic shapes consistent with the module:
    #   batch=2, seq=8, hidden=32, vocab=256, lora rank=8, alpha=0.5
    B, S, H, V, r = 2, 8, 32, 256, 8
    alpha = 0.5
    lora_alpha = 16.0
    scaling = lora_alpha / r   # standard PEFT LoRA scaling

    key = jax.random.PRNGKey(0)
    kx, kw, kag, kbg, kal, kbl = jax.random.split(key, 6)

    x = jax.random.normal(kx, (B, S, H), dtype=jnp.float32)
    # Frozen base lm_head weight (shared by both adapter branches).
    w = jax.random.normal(kw, (H, V), dtype=jnp.float32) * 0.05
    # Global adapter (would come from set_peft_model_state_dict in the module).
    a_g = jax.random.normal(kag, (H, r), dtype=jnp.float32) * 0.05
    b_g = jax.random.normal(kbg, (r, V), dtype=jnp.float32) * 0.05
    # Local (trainable) adapter; PEFT inits B to zeros - random here so the
    # blend is non-trivial and numerically checkable.
    a_l = jax.random.normal(kal, (H, r), dtype=jnp.float32) * 0.05
    b_l = jax.random.normal(kbl, (r, V), dtype=jnp.float32) * 0.05

    # One-time weight preparation (per adapter update, NOT per forward call).
    prepared = prepare_weighted_adapter_weights(w, a_g, b_g, a_l, b_l,
                                                scaling=scaling)

    out = weighted_adapter_forward(x, prepared, alpha=alpha)
    out = jax.block_until_ready(out)
    assert out.shape == (B, S, V)
    out_f32 = out.astype(jnp.float32)

    # Tight check against a reference applying the same fusion + bf16 rounding
    # (validates the kernel's matmuls / tiling / padding exactly).
    ref_matched = reference_forward_matched(
        x, w, a_g, b_g, a_l, b_l, alpha=alpha, scaling=scaling).astype(jnp.float32)
    assert jnp.max(jnp.abs(out_f32 - ref_matched)) < 5e-3

    # Looser check against the pure-f32 module semantics (two adapter forwards
    # + alpha blend); slack accounts for bf16 operands and bf16 logits output.
    ref_f32 = reference_forward(x, w, a_g, b_g, a_l, b_l,
                                alpha=alpha, scaling=scaling)
    assert jnp.max(jnp.abs(out_f32 - ref_f32)) < 3e-2

    # TODO(synk): the full transformer trunk of the base causal LM
    # (attention/MLP stacks) and the 4-bit quantization of the frozen base are
    # not reproduced; the kernel covers the LoRA-adapted projection + weighted
    # adapter blend.
    print("KERNEL_OK")
</pallas_src>

<mosaic_0001>
module attributes {stable_mosaic.version = 11 : i64} {
  func.func @_weighted_adapter_kernel(%arg0: i32, %arg1: i32, %arg2: memref<16x32xbf16, #tpu.memory_space<vmem>>, %arg3: memref<32x256xbf16, #tpu.memory_space<vmem>>, %arg4: memref<16x128xbf16, #tpu.memory_space<vmem>>, %arg5: memref<128x256xbf16, #tpu.memory_space<vmem>>, %arg6: memref<16x256xbf16, #tpu.memory_space<vmem>>) attributes {dimension_semantics = [#tpu.dimension_semantics<parallel>, #tpu.dimension_semantics<parallel>], iteration_bounds = array<i64: 1, 1>, scalar_prefetch = 0 : i64, scratch_operands = 0 : i64, tpu.core_type = #tpu.core_type<tc>, window_params = [{transform_indices = @transform_0, window_bounds = array<i64: 16, 32>}, {transform_indices = @transform_1, window_bounds = array<i64: 32, 256>}, {transform_indices = @transform_2, window_bounds = array<i64: 16, 128>}, {transform_indices = @transform_3, window_bounds = array<i64: 128, 256>}, {transform_indices = @transform_4, window_bounds = array<i64: 16, 256>}]} {
    %c0 = arith.constant 0 : index
    %c0_0 = arith.constant 0 : index
    %0 = vector.load %arg2[%c0, %c0_0] : memref<16x32xbf16, #tpu.memory_space<vmem>>, vector<16x32xbf16>
    %c0_1 = arith.constant 0 : index
    %c0_2 = arith.constant 0 : index
    %1 = vector.load %arg3[%c0_1, %c0_2] : memref<32x256xbf16, #tpu.memory_space<vmem>>, vector<32x256xbf16>
    %cst = arith.constant dense<0.000000e+00> : vector<16x256xf32>
    %2 = tpu.matmul %0, %1, %cst {dimension_numbers = #tpu.dot_dimension_numbers<[1], [0], [0], [1], [0, 0, 1, 1], [], []>} : vector<16x32xbf16>, vector<32x256xbf16>, vector<16x256xf32> -> vector<16x256xf32>
    %c0_3 = arith.constant 0 : index
    %c0_4 = arith.constant 0 : index
    %3 = vector.load %arg4[%c0_3, %c0_4] : memref<16x128xbf16, #tpu.memory_space<vmem>>, vector<16x128xbf16>
    %c0_5 = arith.constant 0 : index
    %c0_6 = arith.constant 0 : index
    %4 = vector.load %arg5[%c0_5, %c0_6] : memref<128x256xbf16, #tpu.memory_space<vmem>>, vector<128x256xbf16>
    %cst_7 = arith.constant dense<0.000000e+00> : vector<16x256xf32>
    %5 = tpu.matmul %3, %4, %cst_7 {dimension_numbers = #tpu.dot_dimension_numbers<[1], [0], [0], [1], [0, 0, 1, 1], [], []>} : vector<16x128xbf16>, vector<128x256xbf16>, vector<16x256xf32> -> vector<16x256xf32>
    %6 = arith.addf %2, %5 : vector<16x256xf32>
    %7 = arith.truncf %6 : vector<16x256xf32> to vector<16x256xbf16>
    %c0_8 = arith.constant 0 : index
    %c0_9 = arith.constant 0 : index
    %8 = vector.load %arg6[%c0_8, %c0_9] : memref<16x256xbf16, #tpu.memory_space<vmem>>, vector<16x256xbf16>
    tpu.vector_store %arg6[%c0_8, %c0_9], %7 {strides = array<i32>} : memref<16x256xbf16, #tpu.memory_space<vmem>>, vector<16x256xbf16>,
    return
  }
  func.func @transform_0(%arg0: i32, %arg1: i32) -> (i32, i32) {
    %c0_i32 = arith.constant 0 : i32
    %c0_i32_0 = arith.constant 0 : i32
    return %arg0, %c0_i32 : i32, i32
  }
  func.func @transform_1(%arg0: i32, %arg1: i32) -> (i32, i32) {
    %c0_i32 = arith.constant 0 : i32
    %c0_i32_0 = arith.constant 0 : i32
    return %c0_i32, %arg1 : i32, i32
  }
  func.func @transform_2(%arg0: i32, %arg1: i32) -> (i32, i32) {
    %c0_i32 = arith.constant 0 : i32
    %c0_i32_0 = arith.constant 0 : i32
    return %arg0, %c0_i32 : i32, i32
  }
  func.func @transform_3(%arg0: i32, %arg1: i32) -> (i32, i32) {
    %c0_i32 = arith.constant 0 : i32
    %c0_i32_0 = arith.constant 0 : i32
    return %c0_i32, %arg1 : i32, i32
  }
  func.func @transform_4(%arg0: i32, %arg1: i32) -> (i32, i32) {
    %c0_i32 = arith.constant 0 : i32
    return %arg0, %arg1 : i32, i32
  }
}

</mosaic_0001>

<llo_original>
// kernel: tpu_custom_call.1
$region0: #{tpu_custom_call.1}
  #allocation0 [shape = 'u32[]', space=smem, size = 0x4, offset = 0x4, fixed_abs, tag = 'smem constant byte address 0x4 - core index']
  #allocation1 [shape = 'u32[72,128]{1,0:T(1,128)}', space=vmem, size = 0x9000, scoped, tag = 'internal scratch']
  %s0 = inlined_call_operand.hbm [shape: bf16[16,32], index: 0, kind: input, shape index: {}]
  %s1 = inlined_call_operand.hbm [shape: bf16[32,256], index: 1, kind: input, shape index: {}]
  %s2 = inlined_call_operand.hbm [shape: bf16[16,128], index: 2, kind: input, shape index: {}]
  %s3 = inlined_call_operand.hbm [shape: bf16[128,256], index: 3, kind: input, shape index: {}]
  %s4 = inlined_call_operand.hbm [shape: bf16[16,256], index: 4, kind: output, shape index: {}]
  %s5 = sld [smem:[#allocation0]]
  $region42: #{tpu_custom_call.1} parent=0
    _
  %s7 = ssub.s32 1, %s5
  %s8 = scalar_select 0, %s7, %s5
  $region1: #{tpu_custom_call.1} parent=0
    #allocation2 [shape = 'u8[4096]{0}', space=vmem, size = 0x1000, scoped, tag = 'input window, operand 0, single buffered']
    #allocation3 [shape = 's32[1]{0}', space=sflag, size = 0x4, scoped, tag = 'scoped memory for tpu_custom_call.1']
    #allocation4 [shape = 's32[1]{0}', space=sflag, size = 0x4, scoped, tag = 'scoped memory for tpu_custom_call.1']
    #allocation5 [shape = 'u8[16384]{0}', space=vmem, size = 0x4000, scoped, tag = 'input window, operand 1, single buffered']
    #allocation6 [shape = 's32[1]{0}', space=sflag, size = 0x4, scoped, tag = 'scoped memory for tpu_custom_call.1']
    #allocation7 [shape = 'u8[4096]{0}', space=vmem, size = 0x1000, scoped, tag = 'input window, operand 2, single buffered']
    #allocation8 [shape = 'u8[65536]{0}', space=vmem, size = 0x10000, scoped, tag = 'input window, operand 3, single buffered']
    #allocation9 [shape = 's32[1]{0}', space=sflag, size = 0x4, scoped, tag = 'scoped memory for tpu_custom_call.1']
    #allocation10 [shape = 'u8[8192]{0}', space=vmem, size = 0x2000, scoped, tag = 'output window, operand 0, single buffered']
    %9 = vsyncpa [#allocation3], 0
    %10 = vsyncpa [#allocation6], 0
    %11 = vsyncpa [#allocation9], 0
    %12 = vsyncpa [#allocation4], 0
    // Predicated region
    $region2: #{tpu_custom_call.1} parent=1 // pred_check
      _
    $region3: #{tpu_custom_call.1} parent=1 // pred_check_branch
      %14 = sbr.rel (0) target = $region5
    $region4: #{tpu_custom_call.1} parent=1 // pred_region
      %16 = vsyncadd [#allocation3], 0
      %s17 = sshll.u32 %s0, 4
      %s18 = int_to_ptr.hbm [resolvable:$true] %s17
      %s19 = sshll.u32 [#allocation2], 4
      %s20 = int_to_ptr.vmem [resolvable:$true] %s19
      %25 = dma.hbm_to_vmem [thread:$0]  %s18, 128, %s20, [#allocation3], 64, 64, 4
    $region5: #{tpu_custom_call.1} parent=1 // pred_fallthru
      _
    // Predicated region
    $region6: #{tpu_custom_call.1} parent=1 // pred_check
      _
    $region7: #{tpu_custom_call.1} parent=1 // pred_check_branch
      %27 = sbr.rel (0) target = $region9
    $region8: #{tpu_custom_call.1} parent=1 // pred_region
      %29 = vsyncadd [#allocation6], 0
      %s30 = sshll.u32 %s1, 4
      %s31 = int_to_ptr.hbm [resolvable:$true] %s30
      %s32 = sshll.u32 [#allocation5], 4
      %s33 = int_to_ptr.vmem [resolvable:$true] %s32
      %38 = dma.hbm_to_vmem [thread:$0]  %s31, 512, %s33, [#allocation6], 128, 128, 8
    $region9: #{tpu_custom_call.1} parent=1 // pred_fallthru
      _
    // Predicated region
    $region10: #{tpu_custom_call.1} parent=1 // pred_check
      _
    $region11: #{tpu_custom_call.1} parent=1 // pred_check_branch
      %40 = sbr.rel (0) target = $region13
    $region12: #{tpu_custom_call.1} parent=1 // pred_region
      %42 = vsyncadd [#allocation6], 0
      %s43 = sshll.u32 %s2, 4
      %s44 = int_to_ptr.hbm [resolvable:$true] %s43
      %s45 = sshll.u32 [#allocation7], 4
      %s46 = int_to_ptr.vmem [resolvable:$true] %s45
      %51 = dma.hbm_to_vmem [thread:$0]  %s44, 128, %s46, [#allocation6], 64, 64, 4
    $region13: #{tpu_custom_call.1} parent=1 // pred_fallthru
      _
    // Predicated region
    $region14: #{tpu_custom_call.1} parent=1 // pred_check
      _
    $region15: #{tpu_custom_call.1} parent=1 // pred_check_branch
      %53 = sbr.rel (0) target = $region17
    $region16: #{tpu_custom_call.1} parent=1 // pred_region
      %55 = vsyncadd [#allocation9], 0
      %s56 = sshll.u32 %s3, 4
      %s57 = int_to_ptr.hbm [resolvable:$true] %s56
      %s58 = sshll.u32 [#allocation8], 4
      %s59 = int_to_ptr.vmem [resolvable:$true] %s58
      %64 = dma.hbm_to_vmem [thread:$0]  %s57, 2048, %s59, [#allocation9], 128, 128, 8
    $region17: #{tpu_custom_call.1} parent=1 // pred_fallthru
      _
    // Predicated region
    $region18: #{tpu_custom_call.1} parent=1 // pred_check
      _
    $region19: #{tpu_custom_call.1} parent=1 // pred_check_branch
      %66 = sbr.rel (0) target = $region21
    $region20: #{tpu_custom_call.1} parent=1 // pred_region
      %68 = dma.done [#allocation3], 128
    $region21: #{tpu_custom_call.1} parent=1 // pred_fallthru
      _
    // Predicated region
    $region22: #{tpu_custom_call.1} parent=1 // pred_check
      _
    $region23: #{tpu_custom_call.1} parent=1 // pred_check_branch
      %70 = sbr.rel (0) target = $region25
    $region24: #{tpu_custom_call.1} parent=1 // pred_region
      %72 = dma.done [#allocation6], 512
    $region25: #{tpu_custom_call.1} parent=1 // pred_fallthru
      _
    // Predicated region
    $region26: #{tpu_custom_call.1} parent=1 // pred_check
      _
    $region27: #{tpu_custom_call.1} parent=1 // pred_check_branch
      %74 = sbr.rel (0) target = $region29
    $region28: #{tpu_custom_call.1} parent=1 // pred_region
      %76 = dma.done [#allocation6], 128
    $region29: #{tpu_custom_call.1} parent=1 // pred_fallthru
      _
    // Predicated region
    $region30: #{tpu_custom_call.1} parent=1 // pred_check
      _
    $region31: #{tpu_custom_call.1} parent=1 // pred_check_branch
      %78 = sbr.rel (0) target = $region33
    $region32: #{tpu_custom_call.1} parent=1 // pred_region
      %80 = dma.done [#allocation9], 2048
    $region33: #{tpu_custom_call.1} parent=1 // pred_fallthru
      _
    %v82 = vld [vmem:[#allocation2] sm:$0xf]
    %v83 = vld [vmem:[#allocation2 + $0x4] sm:$0xf]
    %v84 = vld [vmem:[#allocation5] sm:$0xff]
    %v85 = vld [vmem:[#allocation5 + $0x8] sm:$0xff]
    %v86 = vld [vmem:[#allocation5 + $0x10] sm:$0xff]
    %v87 = vld [vmem:[#allocation5 + $0x18] sm:$0xff]
    %v88 = vld [vmem:[#allocation7] sm:$0xf]
    %v89 = vld [vmem:[#allocation7 + $0x4] sm:$0xf]
    %v90 = vld [vmem:[#allocation8] sm:$0xff]
    %v91 = vld [vmem:[#allocation8 + $0x8] sm:$0xff]
    %v92 = vld [vmem:[#allocation8 + $0x10] sm:$0xff]
    %v93 = vld [vmem:[#allocation8 + $0x18] sm:$0xff]
    %v94 = vld [vmem:[#allocation8 + $0x20] sm:$0xff]
    %v95 = vld [vmem:[#allocation8 + $0x28] sm:$0xff]
    %v96 = vld [vmem:[#allocation8 + $0x30] sm:$0xff]
    %v97 = vld [vmem:[#allocation8 + $0x38] sm:$0xff]
    %v98 = vld [vmem:[#allocation8 + $0x40] sm:$0xff]
    %v99 = vld [vmem:[#allocation8 + $0x48] sm:$0xff]
    %v100 = vld [vmem:[#allocation8 + $0x50] sm:$0xff]
    %v101 = vld [vmem:[#allocation8 + $0x58] sm:$0xff]
    %v102 = vld [vmem:[#allocation8 + $0x60] sm:$0xff]
    %v103 = vld [vmem:[#allocation8 + $0x68] sm:$0xff]
    %v104 = vld [vmem:[#allocation8 + $0x70] sm:$0xff]
    %v105 = vld [vmem:[#allocation8 + $0x78] sm:$0xff]
    %v108 = vunpack.c.l.b16 %v88
    %v109 = vunpack.c.l.b16 %v89
    %v110 = vpack.c.b16 %v109, %v108
    %v128 = vunpack.c.l.b16 %v90
    %v129 = vunpack.c.h.b16 %v90
    %v130 = vunpack.c.l.b16 %v91
    %v131 = vunpack.c.h.b16 %v91
    %v132 = vunpack.c.l.b16 %v92
    %v133 = vunpack.c.h.b16 %v92
    %v134 = vunpack.c.l.b16 %v93
    %v135 = vunpack.c.h.b16 %v93
    %v136 = vunpack.c.l.b16 %v94
    %v137 = vunpack.c.h.b16 %v94
    %v138 = vunpack.c.l.b16 %v95
    %v139 = vunpack.c.h.b16 %v95
    %v140 = vunpack.c.l.b16 %v96
    %v141 = vunpack.c.h.b16 %v96
    %v142 = vunpack.c.l.b16 %v97
    %v143 = vunpack.c.h.b16 %v97
    %v144 = vunpack.c.l.b16 %v98
    %v145 = vunpack.c.h.b16 %v98
    %v146 = vunpack.c.l.b16 %v99
    %v147 = vunpack.c.h.b16 %v99
    %v148 = vunpack.c.l.b16 %v100
    %v149 = vunpack.c.h.b16 %v100
    %v150 = vunpack.c.l.b16 %v101
    %v151 = vunpack.c.h.b16 %v101
    %v152 = vunpack.c.l.b16 %v102
    %v153 = vunpack.c.h.b16 %v102
    %v154 = vunpack.c.l.b16 %v103
    %v155 = vunpack.c.h.b16 %v103
    %v156 = vunpack.c.l.b16 %v104
    %v157 = vunpack.c.h.b16 %v104
    %v158 = vunpack.c.l.b16 %v105
    %v159 = vunpack.c.h.b16 %v105
    %v160 = vpack.c.b16 %v130, %v128
    %v161 = vpack.c.b16 %v131, %v129
    %v162 = vpack.c.b16 %v134, %v132
    %v163 = vpack.c.b16 %v135, %v133
    %v164 = vpack.c.b16 %v138, %v136
    %v165 = vpack.c.b16 %v139, %v137
    %v166 = vpack.c.b16 %v142, %v140
    %v167 = vpack.c.b16 %v143, %v141
    %v168 = vpack.c.b16 %v146, %v144
    %v169 = vpack.c.b16 %v147, %v145
    %v170 = vpack.c.b16 %v150, %v148
    %v171 = vpack.c.b16 %v151, %v149
    %v172 = vpack.c.b16 %v154, %v152
    %v173 = vpack.c.b16 %v155, %v153
    %v174 = vpack.c.b16 %v158, %v156
    %v175 = vpack.c.b16 %v159, %v157
    %192 = vmatpush.bf16.msra.mxu0 %v174
    %193 = vmatpush.bf16.msra.mxu0 %v172
    %194 = vmatpush.bf16.msra.mxu0 %v170
    %195 = vmatpush.bf16.msra.mxu0 %v168
    %196 = vmatpush.bf16.msra.mxu0 %v166
    %197 = vmatpush.bf16.msra.mxu0 %v164
    %198 = vmatpush.bf16.msra.mxu0 %v162
    %199 = vmatpush.bf16.msra.mxu0 %v160
    %200 = vmatmul.bf16.gmra.mxu0 %v110
    %v201 = vpop.f32.mrf.mxu0
    %v202 = vadd.f32 0.0, %v201
    %v203 = vpop.f32.mrf.mxu0
    %v204 = vadd.f32 0.0, %v203
    %205 = vdwg.mxu0
    %206 = vmatpush.bf16.msra.mxu0 %v175
    %207 = vmatpush.bf16.msra.mxu0 %v173
    %208 = vmatpush.bf16.msra.mxu0 %v171
    %209 = vmatpush.bf16.msra.mxu0 %v169
    %210 = vmatpush.bf16.msra.mxu0 %v167
    %211 = vmatpush.bf16.msra.mxu0 %v165
    %212 = vmatpush.bf16.msra.mxu0 %v163
    %213 = vmatpush.bf16.msra.mxu0 %v161
    %214 = vmatmul.bf16.gmra.mxu0 %v110
    %v215 = vpop.f32.mrf.mxu0
    %v216 = vadd.f32 0.0, %v215
    %v217 = vpop.f32.mrf.mxu0
    %v218 = vadd.f32 0.0, %v217
    %219 = vdwg.mxu0
    %v222 = vunpack.c.l.b16 %v82
    %v223 = vunpack.c.l.b16 %v83
    %v224 = vpack.c.b16 %v223, %v222
    %v229 = vunpack.c.l.b16 %v84
    %v230 = vunpack.c.h.b16 %v84
    %v231 = vunpack.c.l.b16 %v85
    %v232 = vunpack.c.h.b16 %v85
    %v233 = vunpack.c.l.b16 %v86
    %v234 = vunpack.c.h.b16 %v86
    %v235 = vunpack.c.l.b16 %v87
    %v236 = vunpack.c.h.b16 %v87
    %v237 = vpack.c.b16 %v231, %v229
    %v238 = vpack.c.b16 %v232, %v230
    %v239 = vpack.c.b16 %v235, %v233
    %v240 = vpack.c.b16 %v236, %v234
    %vm245 = vcmask 261120
    %v247 = vsel %vm245, %v224, 0
    %249 = vmatpush.bf16.msra.mxu0 0
    %250 = vmatpush.bf16.msra.mxu0 0
    %251 = vmatpush.bf16.msra.mxu0 0
    %252 = vmatpush.bf16.msra.mxu0 0
    %253 = vmatpush.bf16.msra.mxu0 0
    %254 = vmatpush.bf16.msra.mxu0 0
    %255 = vmatpush.bf16.msra.mxu0 %v239
    %256 = vmatpush.bf16.msra.mxu0 %v237
    %257 = vmatmul.bf16.gmra.mxu0 %v247
    %v258 = vpop.f32.mrf.mxu0
    %v259 = vadd.f32 %v202, %v258
    %v260 = vpop.f32.mrf.mxu0
    %v261 = vadd.f32 %v204, %v260
    %262 = vdwg.mxu0
    %263 = vmatpush.bf16.msra.mxu0 0
    %264 = vmatpush.bf16.msra.mxu0 0
    %265 = vmatpush.bf16.msra.mxu0 0
    %266 = vmatpush.bf16.msra.mxu0 0
    %267 = vmatpush.bf16.msra.mxu0 0
    %268 = vmatpush.bf16.msra.mxu0 0
    %269 = vmatpush.bf16.msra.mxu0 %v240
    %270 = vmatpush.bf16.msra.mxu0 %v238
    %271 = vmatmul.bf16.gmra.mxu0 %v247
    %v272 = vpop.f32.mrf.mxu0
    %v273 = vadd.f32 %v216, %v272
    %v274 = vpop.f32.mrf.mxu0
    %v275 = vadd.f32 %v218, %v274
    %276 = vdwg.mxu0
    %v277 = vpack.c.bf16 %v273, %v259
    %v278 = vpack.c.bf16 %v275, %v261
    %279 = vst [vmem:[#allocation10] sm:$0xff] %v277
    %280 = vst [vmem:[#allocation10 + $0x8] sm:$0xff] %v278
    // Predicated region
    $region34: #{tpu_custom_call.1} parent=1 // pred_check
      _
    $region35: #{tpu_custom_call.1} parent=1 // pred_check_branch
      %282 = sbr.rel (0) target = $region37
    $region36: #{tpu_custom_call.1} parent=1 // pred_region
      %284 = vsyncadd [#allocation4], 0
      %s285 = sshll.u32 [#allocation10], 4
      %s286 = int_to_ptr.vmem [resolvable:$true] %s285
      %s287 = sshll.u32 %s4, 4
      %s288 = int_to_ptr.hbm [resolvable:$true] %s287
      %293 = dma.vmem_to_hbm [thread:$0]  %s286, 256, %s288, [#allocation4], 128, 128, 8
    $region37: #{tpu_custom_call.1} parent=1 // pred_fallthru
      _
    // Predicated region
    $region38: #{tpu_custom_call.1} parent=1 // pred_check
      _
    $region39: #{tpu_custom_call.1} parent=1 // pred_check_branch
      %295 = sbr.rel (0) target = $region41
    $region40: #{tpu_custom_call.1} parent=1 // pred_region
      %297 = dma.done [#allocation4], 256
    $region41: #{tpu_custom_call.1} parent=1 // pred_fallthru
      _
    %298 = vsyncpa [#allocation3], 1
    %299 = vsyncpa [#allocation6], 1
    %300 = vsyncpa [#allocation9], 1
    %301 = vsyncpa [#allocation4], 1

</llo_original>
